<compile_context>
chip_gen: v7x
topology: tpu7x:2x2x1
jax: 0.10.0
libtpu: 0.0.40
codegen_flags: <defaults>
</compile_context>

<pallas_src>
import functools

import jax
import jax.numpy as jnp
from jax import lax
from jax.experimental import pallas as pl
from jax.experimental.pallas import tpu as pltpu


def make_position_encoding_cache(embedding_dim, max_len):
    # same construction as _generate_position_encoding_cache (deterministic)
    pos = jnp.arange(max_len, dtype=jnp.float32)[:, None]                   # [max_len, 1]
    freq = jnp.exp(jnp.arange(0, embedding_dim, 2, dtype=jnp.float32)
                   / embedding_dim * -jnp.log(10000.0))                      # [D/2]
    cache = jnp.zeros((max_len, embedding_dim), jnp.float32)
    cache = cache.at[:, 0::2].set(jnp.sin(pos * freq))
    cache = cache.at[:, 1::2].set(jnp.cos(pos * freq))
    return cache


def _gather_tile_kernel(pos_ref, cache_ref, out_ref, *, rows_per_tile, unroll):
    # pos_ref   : SMEM int32 [n_pad]          (scalar prefetch; drives gather)
    # cache_ref : VMEM f32  [max_len, D]      (resident: constant index_map)
    # out_ref   : VMEM f32  [rows_per_tile, D]
    base = pl.program_id(0) * rows_per_tile

    def body(r, carry):
        p = pos_ref[base + r]
        out_ref[pl.ds(r, 1), :] = cache_ref[pl.ds(p, 1), :]
        return carry

    lax.fori_loop(0, rows_per_tile, body, 0, unroll=unroll)


def _round_up(x, m):
    return (x + m - 1) // m * m


def positional_encoding_forward(attention_mask, cache, past_key_values_length=0):
    attention_mask = attention_mask.astype(jnp.int32)
    B, S = attention_mask.shape
    max_len, D = cache.shape
    S_out = S - past_key_values_length
    if S_out > max_len:
        # mirror of the dynamic cache regrowth in the PyTorch module (host-side glue)
        max_len = S_out
        cache = make_position_encoding_cache(D, max_len)

    # Position computation hoisted out of the kernel: only an O(B*S) int32 op.
    cs = jnp.cumsum(attention_mask, axis=1, dtype=jnp.int32)                # [B, S]
    positions = cs * attention_mask - 1                                      # [B, S]
    positions = positions[:, past_key_values_length:]                        # [B, S_out]
    # torch-style negative indexing: -1 wraps to max_len - 1
    positions = jnp.where(positions < 0, positions + max_len, positions)
    n_rows = B * S_out
    pos_flat = positions.reshape(n_rows).astype(jnp.int32)                   # [B*S_out]

    # Row-tile size: amortize the per-grid-step overhead; keep divisible by 8
    # so the (TM, D) output block satisfies sublane tiling.
    TM = 256 if n_rows >= 256 else _round_up(n_rows, 8)
    n_pad = _round_up(n_rows, TM)
    if n_pad > n_rows:
        pos_flat = jnp.concatenate(
            [pos_flat, jnp.zeros((n_pad - n_rows,), jnp.int32)])
    n_tiles = n_pad // TM
    unroll = 8 if TM >= 64 else True

    kernel = functools.partial(_gather_tile_kernel, rows_per_tile=TM, unroll=unroll)

    # VMEM budget: resident cache + double-buffered output tile (lane-padded).
    lane_pad = _round_up(D, 128)
    vmem_needed = max_len * lane_pad * 4 + 2 * TM * lane_pad * 4 + (1 << 20)
    vmem_limit = int(min(64 * 2**20, max(32 * 2**20, vmem_needed)))

    out = pl.pallas_call(
        kernel,
        out_shape=jax.ShapeDtypeStruct((n_pad, D), jnp.float32),
        grid_spec=pltpu.PrefetchScalarGridSpec(
            num_scalar_prefetch=1,
            grid=(n_tiles,),
            in_specs=[
                # full cache, constant block index -> DMA'd HBM->VMEM once and
                # kept resident across all grid steps
                pl.BlockSpec((max_len, D), lambda i, pos: (0, 0)),
            ],
            out_specs=pl.BlockSpec((TM, D), lambda i, pos: (i, 0)),
        ),
        compiler_params=pltpu.CompilerParams(
            # row-tiles are independent -> shard across v7x's 2 TCs
            dimension_semantics=("parallel",),
            vmem_limit_bytes=vmem_limit,
        ),
    )(pos_flat, cache)

    # TODO(synk): for D < 128 the per-row stores are lane-masked; packing 128/D
    # rows per lane-dense slab would remove the masking but complicates indexing.
    return out[:n_rows].reshape(B, S_out, D)


if __name__ == "__main__":
    B, S, D, MAX_LEN = 2, 8, 32, 256
    PAST = 0

    key = jax.random.PRNGKey(0)
    # attention mask of 0/1 (LongTensor semantics -> int32 here)
    attention_mask = jax.random.randint(key, (B, S), 0, 2, dtype=jnp.int32)

    cache = make_position_encoding_cache(D, MAX_LEN)

    out = positional_encoding_forward(attention_mask, cache, PAST)
    out = jax.block_until_ready(out)

    # pure-JAX reference (same semantics as the PyTorch forward)
    cs = jnp.cumsum(attention_mask, axis=1)
    positions = cs.astype(jnp.int32) * attention_mask - 1
    positions = positions[:, PAST:]
    pos_w = jnp.where(positions < 0, positions + MAX_LEN, positions)
    ref = cache[pos_w]

    assert out.shape == (B, S - PAST, D), out.shape
    assert jnp.allclose(out, ref, atol=1e-6), float(jnp.max(jnp.abs(out - ref)))

    # also exercise past_key_values_length > 0 (static slice path, padded tile)
    PAST2 = 2
    out2 = jax.block_until_ready(
        positional_encoding_forward(attention_mask, cache, PAST2))
    ref2 = ref[:, PAST2:]
    assert out2.shape == (B, S - PAST2, D), out2.shape
    assert jnp.allclose(out2, ref2, atol=1e-6), float(jnp.max(jnp.abs(out2 - ref2)))

    print("KERNEL_OK")
</pallas_src>

<mosaic_0001>
module attributes {stable_mosaic.version = 11 : i64} {
  func.func @_gather_tile_kernel(%arg0: i32, %arg1: memref<16xi32, #tpu.memory_space<smem>>, %arg2: memref<256x32xf32, #tpu.memory_space<vmem>>, %arg3: memref<16x32xf32, #tpu.memory_space<vmem>>) attributes {dimension_semantics = [#tpu.dimension_semantics<parallel>], iteration_bounds = array<i64: 1>, scalar_prefetch = 1 : i64, scratch_operands = 0 : i64, tpu.core_type = #tpu.core_type<tc>, window_params = [{pipeline_mode = #tpu.pipeline_mode<synchronous>, transform_indices = @transform_0, window_bounds = array<i64: 256, 32>}, {transform_indices = @transform_1, window_bounds = array<i64: 16, 32>}]} {
    %c16_i32 = arith.constant 16 : i32
    %0 = arith.muli %arg0, %c16_i32 : i32
    %c0_i32 = arith.constant 0 : i32
    %1 = arith.addi %0, %c0_i32 : i32
    %2 = arith.index_cast %1 : i32 to index
    %3 = memref.load %arg1[%2] : memref<16xi32, #tpu.memory_space<smem>>
    %4 = arith.index_cast %3 : i32 to index
    %c0 = arith.constant 0 : index
    %5 = vector.load %arg2[%4, %c0] : memref<256x32xf32, #tpu.memory_space<vmem>>, vector<1x32xf32>
    %6 = arith.index_cast %c0_i32 : i32 to index
    %c0_0 = arith.constant 0 : index
    %7 = vector.load %arg3[%6, %c0_0] : memref<16x32xf32, #tpu.memory_space<vmem>>, vector<1x32xf32>
    tpu.vector_store %arg3[%6, %c0_0], %5 {strides = array<i32>} : memref<16x32xf32, #tpu.memory_space<vmem>>, vector<1x32xf32>,
    %c1_i32 = arith.constant 1 : i32
    %8 = arith.addi %0, %c1_i32 : i32
    %9 = arith.index_cast %8 : i32 to index
    %10 = memref.load %arg1[%9] : memref<16xi32, #tpu.memory_space<smem>>
    %11 = arith.index_cast %10 : i32 to index
    %c0_1 = arith.constant 0 : index
    %12 = vector.load %arg2[%11, %c0_1] : memref<256x32xf32, #tpu.memory_space<vmem>>, vector<1x32xf32>
    %13 = arith.index_cast %c1_i32 : i32 to index
    %c0_2 = arith.constant 0 : index
    %14 = vector.load %arg3[%13, %c0_2] : memref<16x32xf32, #tpu.memory_space<vmem>>, vector<1x32xf32>
    tpu.vector_store %arg3[%13, %c0_2], %12 {strides = array<i32>} : memref<16x32xf32, #tpu.memory_space<vmem>>, vector<1x32xf32>,
    %c2_i32 = arith.constant 2 : i32
    %15 = arith.addi %0, %c2_i32 : i32
    %16 = arith.index_cast %15 : i32 to index
    %17 = memref.load %arg1[%16] : memref<16xi32, #tpu.memory_space<smem>>
    %18 = arith.index_cast %17 : i32 to index
    %c0_3 = arith.constant 0 : index
    %19 = vector.load %arg2[%18, %c0_3] : memref<256x32xf32, #tpu.memory_space<vmem>>, vector<1x32xf32>
    %20 = arith.index_cast %c2_i32 : i32 to index
    %c0_4 = arith.constant 0 : index
    %21 = vector.load %arg3[%20, %c0_4] : memref<16x32xf32, #tpu.memory_space<vmem>>, vector<1x32xf32>
    tpu.vector_store %arg3[%20, %c0_4], %19 {strides = array<i32>} : memref<16x32xf32, #tpu.memory_space<vmem>>, vector<1x32xf32>,
    %c3_i32 = arith.constant 3 : i32
    %22 = arith.addi %0, %c3_i32 : i32
    %23 = arith.index_cast %22 : i32 to index
    %24 = memref.load %arg1[%23] : memref<16xi32, #tpu.memory_space<smem>>
    %25 = arith.index_cast %24 : i32 to index
    %c0_5 = arith.constant 0 : index
    %26 = vector.load %arg2[%25, %c0_5] : memref<256x32xf32, #tpu.memory_space<vmem>>, vector<1x32xf32>
    %27 = arith.index_cast %c3_i32 : i32 to index
    %c0_6 = arith.constant 0 : index
    %28 = vector.load %arg3[%27, %c0_6] : memref<16x32xf32, #tpu.memory_space<vmem>>, vector<1x32xf32>
    tpu.vector_store %arg3[%27, %c0_6], %26 {strides = array<i32>} : memref<16x32xf32, #tpu.memory_space<vmem>>, vector<1x32xf32>,
    %c4_i32 = arith.constant 4 : i32
    %29 = arith.addi %0, %c4_i32 : i32
    %30 = arith.index_cast %29 : i32 to index
    %31 = memref.load %arg1[%30] : memref<16xi32, #tpu.memory_space<smem>>
    %32 = arith.index_cast %31 : i32 to index
    %c0_7 = arith.constant 0 : index
    %33 = vector.load %arg2[%32, %c0_7] : memref<256x32xf32, #tpu.memory_space<vmem>>, vector<1x32xf32>
    %34 = arith.index_cast %c4_i32 : i32 to index
    %c0_8 = arith.constant 0 : index
    %35 = vector.load %arg3[%34, %c0_8] : memref<16x32xf32, #tpu.memory_space<vmem>>, vector<1x32xf32>
    tpu.vector_store %arg3[%34, %c0_8], %33 {strides = array<i32>} : memref<16x32xf32, #tpu.memory_space<vmem>>, vector<1x32xf32>,
    %c5_i32 = arith.constant 5 : i32
    %36 = arith.addi %0, %c5_i32 : i32
    %37 = arith.index_cast %36 : i32 to index
    %38 = memref.load %arg1[%37] : memref<16xi32, #tpu.memory_space<smem>>
    %39 = arith.index_cast %38 : i32 to index
    %c0_9 = arith.constant 0 : index
    %40 = vector.load %arg2[%39, %c0_9] : memref<256x32xf32, #tpu.memory_space<vmem>>, vector<1x32xf32>
    %41 = arith.index_cast %c5_i32 : i32 to index
    %c0_10 = arith.constant 0 : index
    %42 = vector.load %arg3[%41, %c0_10] : memref<16x32xf32, #tpu.memory_space<vmem>>, vector<1x32xf32>
    tpu.vector_store %arg3[%41, %c0_10], %40 {strides = array<i32>} : memref<16x32xf32, #tpu.memory_space<vmem>>, vector<1x32xf32>,
    %c6_i32 = arith.constant 6 : i32
    %43 = arith.addi %0, %c6_i32 : i32
    %44 = arith.index_cast %43 : i32 to index
    %45 = memref.load %arg1[%44] : memref<16xi32, #tpu.memory_space<smem>>
    %46 = arith.index_cast %45 : i32 to index
    %c0_11 = arith.constant 0 : index
    %47 = vector.load %arg2[%46, %c0_11] : memref<256x32xf32, #tpu.memory_space<vmem>>, vector<1x32xf32>
    %48 = arith.index_cast %c6_i32 : i32 to index
    %c0_12 = arith.constant 0 : index
    %49 = vector.load %arg3[%48, %c0_12] : memref<16x32xf32, #tpu.memory_space<vmem>>, vector<1x32xf32>
    tpu.vector_store %arg3[%48, %c0_12], %47 {strides = array<i32>} : memref<16x32xf32, #tpu.memory_space<vmem>>, vector<1x32xf32>,
    %c7_i32 = arith.constant 7 : i32
    %50 = arith.addi %0, %c7_i32 : i32
    %51 = arith.index_cast %50 : i32 to index
    %52 = memref.load %arg1[%51] : memref<16xi32, #tpu.memory_space<smem>>
    %53 = arith.index_cast %52 : i32 to index
    %c0_13 = arith.constant 0 : index
    %54 = vector.load %arg2[%53, %c0_13] : memref<256x32xf32, #tpu.memory_space<vmem>>, vector<1x32xf32>
    %55 = arith.index_cast %c7_i32 : i32 to index
    %c0_14 = arith.constant 0 : index
    %56 = vector.load %arg3[%55, %c0_14] : memref<16x32xf32, #tpu.memory_space<vmem>>, vector<1x32xf32>
    tpu.vector_store %arg3[%55, %c0_14], %54 {strides = array<i32>} : memref<16x32xf32, #tpu.memory_space<vmem>>, vector<1x32xf32>,
    %c8_i32 = arith.constant 8 : i32
    %57 = arith.addi %0, %c8_i32 : i32
    %58 = arith.index_cast %57 : i32 to index
    %59 = memref.load %arg1[%58] : memref<16xi32, #tpu.memory_space<smem>>
    %60 = arith.index_cast %59 : i32 to index
    %c0_15 = arith.constant 0 : index
    %61 = vector.load %arg2[%60, %c0_15] : memref<256x32xf32, #tpu.memory_space<vmem>>, vector<1x32xf32>
    %62 = arith.index_cast %c8_i32 : i32 to index
    %c0_16 = arith.constant 0 : index
    %63 = vector.load %arg3[%62, %c0_16] : memref<16x32xf32, #tpu.memory_space<vmem>>, vector<1x32xf32>
    tpu.vector_store %arg3[%62, %c0_16], %61 {strides = array<i32>} : memref<16x32xf32, #tpu.memory_space<vmem>>, vector<1x32xf32>,
    %c9_i32 = arith.constant 9 : i32
    %64 = arith.addi %0, %c9_i32 : i32
    %65 = arith.index_cast %64 : i32 to index
    %66 = memref.load %arg1[%65] : memref<16xi32, #tpu.memory_space<smem>>
    %67 = arith.index_cast %66 : i32 to index
    %c0_17 = arith.constant 0 : index
    %68 = vector.load %arg2[%67, %c0_17] : memref<256x32xf32, #tpu.memory_space<vmem>>, vector<1x32xf32>
    %69 = arith.index_cast %c9_i32 : i32 to index
    %c0_18 = arith.constant 0 : index
    %70 = vector.load %arg3[%69, %c0_18] : memref<16x32xf32, #tpu.memory_space<vmem>>, vector<1x32xf32>
    tpu.vector_store %arg3[%69, %c0_18], %68 {strides = array<i32>} : memref<16x32xf32, #tpu.memory_space<vmem>>, vector<1x32xf32>,
    %c10_i32 = arith.constant 10 : i32
    %71 = arith.addi %0, %c10_i32 : i32
    %72 = arith.index_cast %71 : i32 to index
    %73 = memref.load %arg1[%72] : memref<16xi32, #tpu.memory_space<smem>>
    %74 = arith.index_cast %73 : i32 to index
    %c0_19 = arith.constant 0 : index
    %75 = vector.load %arg2[%74, %c0_19] : memref<256x32xf32, #tpu.memory_space<vmem>>, vector<1x32xf32>
    %76 = arith.index_cast %c10_i32 : i32 to index
    %c0_20 = arith.constant 0 : index
    %77 = vector.load %arg3[%76, %c0_20] : memref<16x32xf32, #tpu.memory_space<vmem>>, vector<1x32xf32>
    tpu.vector_store %arg3[%76, %c0_20], %75 {strides = array<i32>} : memref<16x32xf32, #tpu.memory_space<vmem>>, vector<1x32xf32>,
    %c11_i32 = arith.constant 11 : i32
    %78 = arith.addi %0, %c11_i32 : i32
    %79 = arith.index_cast %78 : i32 to index
    %80 = memref.load %arg1[%79] : memref<16xi32, #tpu.memory_space<smem>>
    %81 = arith.index_cast %80 : i32 to index
    %c0_21 = arith.constant 0 : index
    %82 = vector.load %arg2[%81, %c0_21] : memref<256x32xf32, #tpu.memory_space<vmem>>, vector<1x32xf32>
    %83 = arith.index_cast %c11_i32 : i32 to index
    %c0_22 = arith.constant 0 : index
    %84 = vector.load %arg3[%83, %c0_22] : memref<16x32xf32, #tpu.memory_space<vmem>>, vector<1x32xf32>
    tpu.vector_store %arg3[%83, %c0_22], %82 {strides = array<i32>} : memref<16x32xf32, #tpu.memory_space<vmem>>, vector<1x32xf32>,
    %c12_i32 = arith.constant 12 : i32
    %85 = arith.addi %0, %c12_i32 : i32
    %86 = arith.index_cast %85 : i32 to index
    %87 = memref.load %arg1[%86] : memref<16xi32, #tpu.memory_space<smem>>
    %88 = arith.index_cast %87 : i32 to index
    %c0_23 = arith.constant 0 : index
    %89 = vector.load %arg2[%88, %c0_23] : memref<256x32xf32, #tpu.memory_space<vmem>>, vector<1x32xf32>
    %90 = arith.index_cast %c12_i32 : i32 to index
    %c0_24 = arith.constant 0 : index
    %91 = vector.load %arg3[%90, %c0_24] : memref<16x32xf32, #tpu.memory_space<vmem>>, vector<1x32xf32>
    tpu.vector_store %arg3[%90, %c0_24], %89 {strides = array<i32>} : memref<16x32xf32, #tpu.memory_space<vmem>>, vector<1x32xf32>,
    %c13_i32 = arith.constant 13 : i32
    %92 = arith.addi %0, %c13_i32 : i32
    %93 = arith.index_cast %92 : i32 to index
    %94 = memref.load %arg1[%93] : memref<16xi32, #tpu.memory_space<smem>>
    %95 = arith.index_cast %94 : i32 to index
    %c0_25 = arith.constant 0 : index
    %96 = vector.load %arg2[%95, %c0_25] : memref<256x32xf32, #tpu.memory_space<vmem>>, vector<1x32xf32>
    %97 = arith.index_cast %c13_i32 : i32 to index
    %c0_26 = arith.constant 0 : index
    %98 = vector.load %arg3[%97, %c0_26] : memref<16x32xf32, #tpu.memory_space<vmem>>, vector<1x32xf32>
    tpu.vector_store %arg3[%97, %c0_26], %96 {strides = array<i32>} : memref<16x32xf32, #tpu.memory_space<vmem>>, vector<1x32xf32>,
    %c14_i32 = arith.constant 14 : i32
    %99 = arith.addi %0, %c14_i32 : i32
    %100 = arith.index_cast %99 : i32 to index
    %101 = memref.load %arg1[%100] : memref<16xi32, #tpu.memory_space<smem>>
    %102 = arith.index_cast %101 : i32 to index
    %c0_27 = arith.constant 0 : index
    %103 = vector.load %arg2[%102, %c0_27] : memref<256x32xf32, #tpu.memory_space<vmem>>, vector<1x32xf32>
    %104 = arith.index_cast %c14_i32 : i32 to index
    %c0_28 = arith.constant 0 : index
    %105 = vector.load %arg3[%104, %c0_28] : memref<16x32xf32, #tpu.memory_space<vmem>>, vector<1x32xf32>
    tpu.vector_store %arg3[%104, %c0_28], %103 {strides = array<i32>} : memref<16x32xf32, #tpu.memory_space<vmem>>, vector<1x32xf32>,
    %c15_i32 = arith.constant 15 : i32
    %106 = arith.addi %0, %c15_i32 : i32
    %107 = arith.index_cast %106 : i32 to index
    %108 = memref.load %arg1[%107] : memref<16xi32, #tpu.memory_space<smem>>
    %109 = arith.index_cast %108 : i32 to index
    %c0_29 = arith.constant 0 : index
    %110 = vector.load %arg2[%109, %c0_29] : memref<256x32xf32, #tpu.memory_space<vmem>>, vector<1x32xf32>
    %111 = arith.index_cast %c15_i32 : i32 to index
    %c0_30 = arith.constant 0 : index
    %112 = vector.load %arg3[%111, %c0_30] : memref<16x32xf32, #tpu.memory_space<vmem>>, vector<1x32xf32>
    tpu.vector_store %arg3[%111, %c0_30], %110 {strides = array<i32>} : memref<16x32xf32, #tpu.memory_space<vmem>>, vector<1x32xf32>,
    %c16_i32_31 = arith.constant 16 : i32
    return
  }
  func.func @transform_0(%arg0: i32, %arg1: memref<16xi32, #tpu.memory_space<smem>>) -> (i32, i32) {
    %c0_i32 = arith.constant 0 : i32
    %c0_i32_0 = arith.constant 0 : i32
    %c0_i32_1 = arith.constant 0 : i32
    return %c0_i32, %c0_i32_0 : i32, i32
  }
  func.func @transform_1(%arg0: i32, %arg1: memref<16xi32, #tpu.memory_space<smem>>) -> (i32, i32) {
    %c0_i32 = arith.constant 0 : i32
    %c0_i32_0 = arith.constant 0 : i32
    return %arg0, %c0_i32 : i32, i32
  }
}

</mosaic_0001>

<llo_original>
// kernel: tpu_custom_call.1
$region0: #{tpu_custom_call.1}
  #allocation0 [shape = 'u32[]', space=smem, size = 0x4, offset = 0x4, fixed_abs, tag = 'smem constant byte address 0x4 - core index']
  #allocation1 [shape = 'u32[144,128]{1,0:T(1,128)}', space=vmem, size = 0x12000, scoped, tag = 'internal scratch']
  #allocation2 [shape = 's32[1]{0}', space=sflag, size = 0x4, scoped, tag = 'scoped memory for tpu_custom_call.1']
  #allocation3 [shape = 'u8[512]{0}', space=smem, size = 0x200, scoped, tag = 'prefetched SMEM operand 0']
  %s0 = inlined_call_operand.vmem [shape: s32[16], index: 0, kind: input, shape index: {}]
  %s1 = inlined_call_operand.vmem [shape: f32[256,32], index: 1, kind: input, shape index: {}]
  %s2 = inlined_call_operand.hbm [shape: f32[16,32], index: 2, kind: output, shape index: {}]
  %s3 = sld [smem:[#allocation0]]
  $region14: #{tpu_custom_call.1} parent=0
    _
  %s5 = ssub.s32 1, %s3
  %s6 = scalar_select 0, %s5, %s3
  %s7 = sshll.u32 %s0, 4
  %s8 = int_to_ptr.vmem [resolvable:$true] %s7
  %10 = dma.vmem_to_smem %s8, 16, [#allocation3], [#allocation2]
  %11 = dma.done [#allocation2], 16
  %12 = sfence
  $region1: #{tpu_custom_call.1} parent=0
    #allocation4 [shape = 'u8[8192]{0}', space=vmem, size = 0x2000, scoped, tag = 'output window, operand 0, single buffered']
    #allocation5 [shape = 's32[1]{0}', space=sflag, size = 0x4, scoped, tag = 'scoped memory for tpu_custom_call.1']
    %13 = vsyncpa [#allocation5], 0
    // Predicated region
    $region2: #{tpu_custom_call.1} parent=1 // pred_check
      _
    $region3: #{tpu_custom_call.1} parent=1 // pred_check_branch
      %15 = sbr.rel (0) target = $region5
    $region4: #{tpu_custom_call.1} parent=1 // pred_region
      _
    $region5: #{tpu_custom_call.1} parent=1 // pred_fallthru
      _
    %s16 = smul.u32 0, 16
    %s17 = sld [smem:[#allocation3 + %s16]]
    %s18 = scalar_lea.vmem %s1, %s17
    %v19 = vld [vmem:[%s18] sm:$0x1]
    %vm20 = vcmask 253952
    %21 = vst.msk [vmem:[#allocation4] sm:$0x1] %vm20, %v19
    %s22 = sadd.s32 %s16, 1
    %s23 = sld [smem:[#allocation3 + %s22]]
    %s24 = scalar_lea.vmem %s1, %s23
    %v25 = vld [vmem:[%s24] sm:$0x1]
    %26 = vst.msk [vmem:[#allocation4 + $0x1] sm:$0x1] %vm20, %v25
    %s27 = sadd.s32 %s16, 2
    %s28 = sld [smem:[#allocation3 + %s27]]
    %s29 = scalar_lea.vmem %s1, %s28
    %v30 = vld [vmem:[%s29] sm:$0x1]
    %31 = vst.msk [vmem:[#allocation4 + $0x2] sm:$0x1] %vm20, %v30
    %s32 = sadd.s32 %s16, 3
    %s33 = sld [smem:[#allocation3 + %s32]]
    %s34 = scalar_lea.vmem %s1, %s33
    %v35 = vld [vmem:[%s34] sm:$0x1]
    %36 = vst.msk [vmem:[#allocation4 + $0x3] sm:$0x1] %vm20, %v35
    %s37 = sadd.s32 %s16, 4
    %s38 = sld [smem:[#allocation3 + %s37]]
    %s39 = scalar_lea.vmem %s1, %s38
    %v40 = vld [vmem:[%s39] sm:$0x1]
    %41 = vst.msk [vmem:[#allocation4 + $0x4] sm:$0x1] %vm20, %v40
    %s42 = sadd.s32 %s16, 5
    %s43 = sld [smem:[#allocation3 + %s42]]
    %s44 = scalar_lea.vmem %s1, %s43
    %v45 = vld [vmem:[%s44] sm:$0x1]
    %46 = vst.msk [vmem:[#allocation4 + $0x5] sm:$0x1] %vm20, %v45
    %s47 = sadd.s32 %s16, 6
    %s48 = sld [smem:[#allocation3 + %s47]]
    %s49 = scalar_lea.vmem %s1, %s48
    %v50 = vld [vmem:[%s49] sm:$0x1]
    %51 = vst.msk [vmem:[#allocation4 + $0x6] sm:$0x1] %vm20, %v50
    %s52 = sadd.s32 %s16, 7
    %s53 = sld [smem:[#allocation3 + %s52]]
    %s54 = scalar_lea.vmem %s1, %s53
    %v55 = vld [vmem:[%s54] sm:$0x1]
    %56 = vst.msk [vmem:[#allocation4 + $0x7] sm:$0x1] %vm20, %v55
    %s57 = sadd.s32 %s16, 8
    %s58 = sld [smem:[#allocation3 + %s57]]
    %s59 = scalar_lea.vmem %s1, %s58
    %v60 = vld [vmem:[%s59] sm:$0x1]
    %61 = vst.msk [vmem:[#allocation4 + $0x8] sm:$0x1] %vm20, %v60
    %s62 = sadd.s32 %s16, 9
    %s63 = sld [smem:[#allocation3 + %s62]]
    %s64 = scalar_lea.vmem %s1, %s63
    %v65 = vld [vmem:[%s64] sm:$0x1]
    %66 = vst.msk [vmem:[#allocation4 + $0x9] sm:$0x1] %vm20, %v65
    %s67 = sadd.s32 %s16, 10
    %s68 = sld [smem:[#allocation3 + %s67]]
    %s69 = scalar_lea.vmem %s1, %s68
    %v70 = vld [vmem:[%s69] sm:$0x1]
    %71 = vst.msk [vmem:[#allocation4 + $0xa] sm:$0x1] %vm20, %v70
    %s72 = sadd.s32 %s16, 11
    %s73 = sld [smem:[#allocation3 + %s72]]
    %s74 = scalar_lea.vmem %s1, %s73
    %v75 = vld [vmem:[%s74] sm:$0x1]
    %76 = vst.msk [vmem:[#allocation4 + $0xb] sm:$0x1] %vm20, %v75
    %s77 = sadd.s32 %s16, 12
    %s78 = sld [smem:[#allocation3 + %s77]]
    %s79 = scalar_lea.vmem %s1, %s78
    %v80 = vld [vmem:[%s79] sm:$0x1]
    %81 = vst.msk [vmem:[#allocation4 + $0xc] sm:$0x1] %vm20, %v80
    %s82 = sadd.s32 %s16, 13
    %s83 = sld [smem:[#allocation3 + %s82]]
    %s84 = scalar_lea.vmem %s1, %s83
    %v85 = vld [vmem:[%s84] sm:$0x1]
    %86 = vst.msk [vmem:[#allocation4 + $0xd] sm:$0x1] %vm20, %v85
    %s87 = sadd.s32 %s16, 14
    %s88 = sld [smem:[#allocation3 + %s87]]
    %s89 = scalar_lea.vmem %s1, %s88
    %v90 = vld [vmem:[%s89] sm:$0x1]
    %91 = vst.msk [vmem:[#allocation4 + $0xe] sm:$0x1] %vm20, %v90
    %s92 = sadd.s32 %s16, 15
    %s93 = sld [smem:[#allocation3 + %s92]]
    %s94 = scalar_lea.vmem %s1, %s93
    %v95 = vld [vmem:[%s94] sm:$0x1]
    %96 = vst.msk [vmem:[#allocation4 + $0xf] sm:$0x1] %vm20, %v95
    // Predicated region
    $region6: #{tpu_custom_call.1} parent=1 // pred_check
      _
    $region7: #{tpu_custom_call.1} parent=1 // pred_check_branch
      %98 = sbr.rel (0) target = $region9
    $region8: #{tpu_custom_call.1} parent=1 // pred_region
      %s100 = ssub.s32 256, 256
      %101 = vsyncadd [#allocation5], %s100
      %s102 = sshll.u32 [#allocation4], 4
      %s103 = int_to_ptr.vmem [resolvable:$true] %s102
      %108 = dma.vmem_to_hbm [thread:$0]  %s103, 256, %s2, [#allocation5], 128, 128, 8
    $region9: #{tpu_custom_call.1} parent=1 // pred_fallthru
      _
    // Predicated region
    $region10: #{tpu_custom_call.1} parent=1 // pred_check
      _
    $region11: #{tpu_custom_call.1} parent=1 // pred_check_branch
      %110 = sbr.rel (0) target = $region13
    $region12: #{tpu_custom_call.1} parent=1 // pred_region
      %111 = dma.done [#allocation5], 256
    $region13: #{tpu_custom_call.1} parent=1 // pred_fallthru
      _
    %112 = vsyncpa [#allocation5], 1

</llo_original>
